<compile_context>
chip_gen: v7x
topology: tpu7x:2x2x1
jax: 0.10.0
libtpu: 0.0.40
codegen_flags: <defaults>
</compile_context>

<pallas_src>
import math

import jax
import jax.numpy as jnp
from jax.experimental import pallas as pl
from jax.experimental.pallas import tpu as pltpu

_SQRT_2_OVER_PI = math.sqrt(2.0 / math.pi)
_TARGET_BLOCK_BYTES = 2 * 1024 * 1024   # ~2 MiB block: ~85% of HBM roofline,
                                        # in+out double-buffered ~ 8 MiB VMEM.
_MAX_TILE_COLS = 4096                   # lane-width cap for very wide rows.


def _gelu_kernel(x_ref, o_ref):
    # Compute in f32 (v5e VPU/EUP have no bf16 path; matches the torch formula).
    x = x_ref[...].astype(jnp.float32)
    # 0.5*x*(1 + tanh(c*(x + 0.044715*x^3))), cubic factored as x*(1+0.044715*x^2)
    # to trim VALU work; tanh runs in the otherwise-idle EUP slot.
    inner = _SQRT_2_OVER_PI * (x * (1.0 + 0.044715 * (x * x)))
    o_ref[...] = (0.5 * x * (1.0 + jnp.tanh(inner))).astype(o_ref.dtype)


def _round_up(n: int, m: int) -> int:
    return ((n + m - 1) // m) * m


def _gelu_2d(x2: jax.Array, *, block_bytes: int) -> jax.Array:
    """Run the kernel on a 2-D slab whose last dim is a multiple of 128
    (or whose chosen block covers the full dims)."""
    rows, cols = x2.shape
    itemsize = jnp.dtype(x2.dtype).itemsize

    # Column tiling: only split very wide rows; keep blocks lane-dense.
    if cols % 128 == 0 and cols > _MAX_TILE_COLS:
        tile_cols = _MAX_TILE_COLS
    else:
        tile_cols = cols
    grid_cols = pl.cdiv(cols, tile_cols)

    # Row tiling: cap block bytes, keep sublane (8) alignment.
    row_bytes = tile_cols * itemsize
    max_tile_rows = max(8, (block_bytes // row_bytes) // 8 * 8)
    if rows % 8 == 0:
        tile_rows = min(rows, max_tile_rows)
        # Prefer >= 2 programs so v7x megacore / DMA pipelining get work.
        if grid_cols == 1 and tile_rows >= rows and rows >= 16:
            tile_rows = _round_up(pl.cdiv(rows, 2), 8)
    else:
        # Not sublane-aligned: legal only as a single block covering all rows.
        # (Callers only reach this branch when rows is small.)
        tile_rows = rows
    grid_rows = pl.cdiv(rows, tile_rows)

    # NOTE: input_output_aliases is skipped on purpose — the wrapper's slab is
    # usually a view of a non-donated caller array, so aliasing would force XLA
    # to insert a defensive copy (an extra HBM pass).
    return pl.pallas_call(
        _gelu_kernel,
        out_shape=jax.ShapeDtypeStruct((rows, cols), x2.dtype),
        grid_spec=pltpu.PrefetchScalarGridSpec(
            num_scalar_prefetch=0,
            grid=(grid_rows, grid_cols),
            in_specs=[pl.BlockSpec((tile_rows, tile_cols), lambda i, j: (i, j))],
            out_specs=pl.BlockSpec((tile_rows, tile_cols), lambda i, j: (i, j)),
        ),
        compiler_params=pltpu.CompilerParams(
            dimension_semantics=("parallel", "parallel"),
            # Headroom for the 4 block buffers; below v7x's 64 MiB physical VMEM.
            vmem_limit_bytes=32 * 1024 * 1024,
        ),
    )(x2)


def gelu(x: jax.Array) -> jax.Array:
    """Tanh-approx GELU matching the PyTorch module's forward."""
    orig_shape = x.shape
    if x.size == 0:
        return x
    itemsize = jnp.dtype(x.dtype).itemsize

    # ---- fast path: last dim already lane-aligned -> no pad, no slice -------
    if x.ndim >= 2 and x.shape[-1] % 128 == 0:
        cols = x.shape[-1]
        rows = x.size // cols
        single_block_ok = (
            rows * min(cols, _MAX_TILE_COLS) * itemsize <= _TARGET_BLOCK_BYTES
        )
        if rows % 8 == 0 or single_block_ok:
            out = _gelu_2d(x.reshape(rows, cols), block_bytes=_TARGET_BLOCK_BYTES)
            return out.reshape(orig_shape)

    # ---- general path: flatten to a lane-dense slab, pad only the flat tail -
    flat = x.reshape(-1)
    n = flat.shape[0]
    c = min(512, _round_up(n, 128))          # lane-dense width, multiple of 128
    rows = pl.cdiv(n, c)
    if rows > 8:
        rows = _round_up(rows, 8)            # sublane-align so rows can be tiled
    padded_n = rows * c
    if padded_n != n:
        flat = jnp.pad(flat, (0, padded_n - n))
    out2 = _gelu_2d(flat.reshape(rows, c), block_bytes=_TARGET_BLOCK_BYTES)
    out_flat = out2.reshape(-1)
    if padded_n != n:
        out_flat = out_flat[:n]
    return out_flat.reshape(orig_shape)


def gelu_ref(x: jax.Array) -> jax.Array:
    """Pure-JAX reference matching the PyTorch formula exactly."""
    xf = x.astype(jnp.float32)
    coef = jnp.sqrt(jnp.float32(2.0 / math.pi))
    y = 0.5 * xf * (1.0 + jnp.tanh(coef * (xf + 0.044715 * xf ** 3)))
    return y.astype(x.dtype)


if __name__ == "__main__":
    k0, k1, k2 = jax.random.split(jax.random.PRNGKey(0), 3)

    # Small shape consistent with an LLM activation: (batch=2, seq=8, hidden=32).
    x = jax.random.normal(k0, (2, 8, 32), dtype=jnp.float32)
    y = jax.block_until_ready(gelu(x))
    assert y.shape == x.shape and y.dtype == x.dtype
    assert jnp.allclose(y, gelu_ref(x), atol=1e-5, rtol=1e-5)

    # Aligned fast path (no pad / no slice), grid split into >= 2 programs.
    xa = jax.random.normal(k1, (16, 256), dtype=jnp.float32)
    ya = jax.block_until_ready(gelu(xa))
    assert jnp.allclose(ya, gelu_ref(xa), atol=1e-5, rtol=1e-5)

    # Ragged shape: exercises the flatten + flat-tail-pad + slice path.
    xr = jax.random.normal(k2, (3, 50), dtype=jnp.float32)
    yr = jax.block_until_ready(gelu(xr))
    assert yr.shape == xr.shape
    assert jnp.allclose(yr, gelu_ref(xr), atol=1e-5, rtol=1e-5)

    print("KERNEL_OK")
</pallas_src>

<mosaic_0001>
module attributes {stable_mosaic.version = 11 : i64} {
  func.func @_gelu_kernel(%arg0: i32, %arg1: i32, %arg2: memref<1x512xf32, #tpu.memory_space<vmem>>, %arg3: memref<1x512xf32, #tpu.memory_space<vmem>>) attributes {dimension_semantics = [#tpu.dimension_semantics<parallel>, #tpu.dimension_semantics<parallel>], iteration_bounds = array<i64: 1, 1>, scalar_prefetch = 0 : i64, scratch_operands = 0 : i64, tpu.core_type = #tpu.core_type<tc>, window_params = [{transform_indices = @transform_0, window_bounds = array<i64: 1, 512>}, {transform_indices = @transform_1, window_bounds = array<i64: 1, 512>}]} {
    %c0 = arith.constant 0 : index
    %c0_0 = arith.constant 0 : index
    %0 = vector.load %arg2[%c0, %c0_0] : memref<1x512xf32, #tpu.memory_space<vmem>>, vector<1x512xf32>
    %1 = arith.mulf %0, %0 : vector<1x512xf32>
    %cst = arith.constant 4.471500e-02 : f32
    %2 = vector.broadcast %cst : f32 to vector<1x512xf32>
    %3 = arith.mulf %2, %1 : vector<1x512xf32>
    %cst_1 = arith.constant 1.000000e+00 : f32
    %4 = vector.broadcast %cst_1 : f32 to vector<1x512xf32>
    %5 = arith.addf %4, %3 : vector<1x512xf32>
    %6 = arith.mulf %0, %5 : vector<1x512xf32>
    %cst_2 = arith.constant 0.797884583 : f32
    %7 = vector.broadcast %cst_2 : f32 to vector<1x512xf32>
    %8 = arith.mulf %7, %6 : vector<1x512xf32>
    %cst_3 = arith.constant 5.000000e-01 : f32
    %9 = vector.broadcast %cst_3 : f32 to vector<1x512xf32>
    %10 = arith.mulf %9, %0 : vector<1x512xf32>
    %11 = math.tanh %8 : vector<1x512xf32>
    %cst_4 = arith.constant 1.000000e+00 : f32
    %12 = vector.broadcast %cst_4 : f32 to vector<1x512xf32>
    %13 = arith.addf %12, %11 : vector<1x512xf32>
    %14 = arith.mulf %10, %13 : vector<1x512xf32>
    %c0_5 = arith.constant 0 : index
    %c0_6 = arith.constant 0 : index
    %15 = vector.load %arg3[%c0_5, %c0_6] : memref<1x512xf32, #tpu.memory_space<vmem>>, vector<1x512xf32>
    tpu.vector_store %arg3[%c0_5, %c0_6], %14 {strides = array<i32>} : memref<1x512xf32, #tpu.memory_space<vmem>>, vector<1x512xf32>,
    return
  }
  func.func @transform_0(%arg0: i32, %arg1: i32) -> (i32, i32) {
    %c0_i32 = arith.constant 0 : i32
    return %arg0, %arg1 : i32, i32
  }
  func.func @transform_1(%arg0: i32, %arg1: i32) -> (i32, i32) {
    %c0_i32 = arith.constant 0 : i32
    return %arg0, %arg1 : i32, i32
  }
}

</mosaic_0001>

<llo_original>
// kernel: tpu_custom_call.1
$region0: #{tpu_custom_call.1}
  #allocation0 [shape = 'u32[]', space=smem, size = 0x4, offset = 0x4, fixed_abs, tag = 'smem constant byte address 0x4 - core index']
  #allocation1 [shape = 'u32[144,128]{1,0:T(1,128)}', space=vmem, size = 0x12000, scoped, tag = 'internal scratch']
  %s0 = inlined_call_operand.hbm [shape: f32[1,512], index: 0, kind: input, shape index: {}]
  %s1 = inlined_call_operand.hbm [shape: f32[1,512], index: 1, kind: output, shape index: {}]
  %s2 = sld [smem:[#allocation0]]
  $region18: #{tpu_custom_call.1} parent=0
    _
  %s4 = ssub.s32 1, %s2
  %s5 = scalar_select 0, %s4, %s2
  $region1: #{tpu_custom_call.1} parent=0
    #allocation2 [shape = 'u8[2048]{0}', space=vmem, size = 0x800, scoped, tag = 'input window, operand 0, single buffered']
    #allocation3 [shape = 's32[1]{0}', space=sflag, size = 0x4, scoped, tag = 'scoped memory for tpu_custom_call.1']
    #allocation4 [shape = 's32[1]{0}', space=sflag, size = 0x4, scoped, tag = 'scoped memory for tpu_custom_call.1']
    #allocation5 [shape = 'u8[2048]{0}', space=vmem, size = 0x800, scoped, tag = 'output window, operand 0, single buffered']
    %6 = vsyncpa [#allocation3], 0
    %7 = vsyncpa [#allocation4], 0
    // Predicated region
    $region2: #{tpu_custom_call.1} parent=1 // pred_check
      _
    $region3: #{tpu_custom_call.1} parent=1 // pred_check_branch
      %9 = sbr.rel (0) target = $region5
    $region4: #{tpu_custom_call.1} parent=1 // pred_region
      %s11 = ssub.s32 64, 64
      %12 = vsyncadd [#allocation3], %s11
      %s14 = sshll.u32 [#allocation2], 4
      %s15 = int_to_ptr.vmem [resolvable:$true] %s14
      %17 = dma.hbm_to_vmem [thread:$0]  %s0, 64, %s15, [#allocation3]
    $region5: #{tpu_custom_call.1} parent=1 // pred_fallthru
      _
    // Predicated region
    $region6: #{tpu_custom_call.1} parent=1 // pred_check
      _
    $region7: #{tpu_custom_call.1} parent=1 // pred_check_branch
      %19 = sbr.rel (0) target = $region9
    $region8: #{tpu_custom_call.1} parent=1 // pred_region
      %20 = dma.done [#allocation3], 64
    $region9: #{tpu_custom_call.1} parent=1 // pred_fallthru
      _
    %v21 = vld [vmem:[#allocation2] sm:$0xf]
    %v22 = vmul.f32 %v21, %v21
    %v23 = vmul.f32 %v22, 0.044715
    %v24 = vadd.f32 %v23, 1.0
    %v25 = vmul.f32 %v21, %v24
    %v26 = vmul.f32 %v25, 0.7978846
    %v27 = vmul.f32 %v21, 0.5
    %v28 = vtanh.pop %v26
    %v29 = vadd.f32 %v28, 1.0
    %v30 = vmul.f32 %v27, %v29
    %v31 = vlaneseq
    %vm32 = vcmp.ge.s32.totalorder %v31, 0
    %vm33 = vcmp.lt.s32.totalorder %v31, 512
    %vm34 = vmand %vm32, %vm33
    %35 = vst.msk [vmem:[#allocation5] sm:$0xf] %vm34, %v30
    // Predicated region
    $region10: #{tpu_custom_call.1} parent=1 // pred_check
      _
    $region11: #{tpu_custom_call.1} parent=1 // pred_check_branch
      %37 = sbr.rel (0) target = $region13
    $region12: #{tpu_custom_call.1} parent=1 // pred_region
      %s39 = ssub.s32 64, 64
      %40 = vsyncadd [#allocation4], %s39
      %s42 = sshll.u32 [#allocation5], 4
      %s43 = int_to_ptr.vmem [resolvable:$true] %s42
      %45 = dma.vmem_to_hbm [thread:$0]  %s43, 64, %s1, [#allocation4]
    $region13: #{tpu_custom_call.1} parent=1 // pred_fallthru
      _
    // Predicated region
    $region14: #{tpu_custom_call.1} parent=1 // pred_check
      _
    $region15: #{tpu_custom_call.1} parent=1 // pred_check_branch
      %47 = sbr.rel (0) target = $region17
    $region16: #{tpu_custom_call.1} parent=1 // pred_region
      %48 = dma.done [#allocation4], 64
    $region17: #{tpu_custom_call.1} parent=1 // pred_fallthru
      _
    %49 = vsyncpa [#allocation3], 1
    %50 = vsyncpa [#allocation4], 1

</llo_original>
